<compile_context>
chip_gen: v7x
topology: tpu7x:2x2x1
jax: 0.10.0
libtpu: 0.0.40
codegen_flags: <defaults>
</compile_context>

<pallas_src>
import jax
import jax.numpy as jnp
from jax.experimental import pallas as pl
from jax.experimental.pallas import tpu as pltpu

SUB = 8              # f32 sublane granularity
LANE = 128           # lane width
GRIDLESS_MAX = 1024  # single whole-array tile (no grid) up to this many rows
TM_MAX = 2048        # largest M tile in the gridded path

T_DIM = 1
H_DIM = 32
Y_DIM = 4
INP_DIM = Y_DIM + T_DIM     # exclude_time=False path
ONES_COL = H_DIM            # hidden lane that carries the constant-1 bias channel
XW = SUB                    # packed input width: [y0..y3, t, 1.0, 0, 0]


def _mlp_kernel(x_ref, w1_ref, w23_ref, out_ref):
    """Fused 3-layer MLP; biases folded into an always-1 input channel.

    x_ref   : (M, 8)         cols [0:4]=y, [4]=t, [5]=1.0, [6:8]=0
    w1_ref  : (8, 128)       layer-1 weight; row 5 holds b1 and the ones
                             passthrough (w1[5, ONES_COL] = 1)
    w23_ref : (2, 128, 128)  layer-2/3 weights (biases in row ONES_COL)
    out_ref : (M, 4)         dy/dt
    """
    h1 = jnp.dot(x_ref[...], w1_ref[...], preferred_element_type=jnp.float32)
    h1 = jnp.maximum(h1, 0.0)                      # ones channel stays 1.0
    h2 = jnp.dot(h1, w23_ref[0], preferred_element_type=jnp.float32)
    h2 = jnp.maximum(h2, 0.0)
    out = jnp.dot(h2, w23_ref[1], preferred_element_type=jnp.float32)
    out_ref[...] = out[:, :Y_DIM].astype(out_ref.dtype)


def _round_up(x, m):
    return ((x + m - 1) // m) * m


def init_params(key):
    """Matches nn.init.normal_(std=0.1), bias=0.  Weights stored as (in, out)."""
    k1, k2, k3 = jax.random.split(key, 3)
    return {
        "w1": 0.1 * jax.random.normal(k1, (INP_DIM, H_DIM), jnp.float32),
        "b1": jnp.zeros((H_DIM,), jnp.float32),
        "w2": 0.1 * jax.random.normal(k2, (H_DIM, H_DIM), jnp.float32),
        "b2": jnp.zeros((H_DIM,), jnp.float32),
        "w3": 0.1 * jax.random.normal(k3, (H_DIM, Y_DIM), jnp.float32),
        "b3": jnp.zeros((Y_DIM,), jnp.float32),
    }


def prepare_packed_params(params):
    """Pad/stack weights ONCE; fold biases into the ones-channel rows."""
    w1 = jnp.zeros((SUB, LANE), jnp.float32)
    w1 = w1.at[:INP_DIM, :H_DIM].set(params["w1"])
    w1 = w1.at[INP_DIM, :H_DIM].set(params["b1"])
    w1 = w1.at[INP_DIM, ONES_COL].set(1.0)          # propagate the ones channel

    w23 = jnp.zeros((2, LANE, LANE), jnp.float32)
    w23 = w23.at[0, :H_DIM, :H_DIM].set(params["w2"])
    w23 = w23.at[0, ONES_COL, :H_DIM].set(params["b2"])
    w23 = w23.at[0, ONES_COL, ONES_COL].set(1.0)     # propagate again
    w23 = w23.at[1, :H_DIM, :Y_DIM].set(params["w3"])
    w23 = w23.at[1, ONES_COL, :Y_DIM].set(params["b3"])
    return {"w1": w1, "w23": w23}


def _pack_inputs(ts, ys):
    """(B,) times + (B, Y_DIM) states -> compact (B, 8) slab with ones channel."""
    B = ys.shape[0]
    return jnp.concatenate(
        [ys,
         ts.reshape(B, 1),
         jnp.ones((B, 1), ys.dtype),
         jnp.zeros((B, XW - INP_DIM - 1), ys.dtype)],
        axis=1,
    )


def _mlp_forward(x8, packed):
    """Run the fused MLP on a compact (B, 8) slab -> (B, Y_DIM)."""
    B = x8.shape[0]
    w1, w23 = packed["w1"], packed["w23"]

    if B <= GRIDLESS_MAX:
        # Single tile: gridless pallas_call, whole arrays resident in VMEM.
        b_pad = _round_up(B, SUB)
        x_p = jnp.pad(x8, ((0, b_pad - B), (0, 0)))
        out = pl.pallas_call(
            _mlp_kernel,
            out_shape=jax.ShapeDtypeStruct((b_pad, Y_DIM), jnp.float32),
        )(x_p, w1, w23)
    else:
        # >= 2 tiles so both v7x TensorCores get work; tiles <= TM_MAX rows to
        # amortize the ~0.35us/step grid overhead. Weights are block-invariant
        # (index_map -> 0) so they stay VMEM-resident across steps.
        tm = min(TM_MAX, _round_up(pl.cdiv(B, 2), SUB))
        grid_m = pl.cdiv(B, tm)
        b_pad = grid_m * tm
        x_p = jnp.pad(x8, ((0, b_pad - B), (0, 0)))
        out = pl.pallas_call(
            _mlp_kernel,
            out_shape=jax.ShapeDtypeStruct((b_pad, Y_DIM), jnp.float32),
            grid=(grid_m,),
            in_specs=[
                pl.BlockSpec((tm, XW), lambda i: (i, 0)),
                pl.BlockSpec((SUB, LANE), lambda i: (0, 0)),
                pl.BlockSpec((2, LANE, LANE), lambda i: (0, 0, 0)),
            ],
            out_specs=pl.BlockSpec((tm, Y_DIM), lambda i: (i, 0)),
            compiler_params=pltpu.CompilerParams(
                dimension_semantics=("parallel",)),
        )(x_p, w1, w23)

    return out[:B]


@jax.jit
def ode_func_time_variate(t, y, packed):
    """JAX/Pallas equivalent of ODEFuncTimeVariate.forward(t, y) (single state)."""
    x8 = _pack_inputs(jnp.reshape(t, (1,)), y[None, :])
    return _mlp_forward(x8, packed)[0]


@jax.jit
def ode_func_time_variate_batched(ts, ys, packed):
    """Batched forward: ts (B,), ys (B, Y_DIM) -> (B, Y_DIM) in ONE kernel call."""
    return _mlp_forward(_pack_inputs(ts, ys), packed)


def _reference(t, y, params):
    """Pure-JAX reference of the same forward (for correctness checks)."""
    yt = jnp.concatenate([y, jnp.reshape(t, (1,))], axis=0)
    h1 = jnp.maximum(yt @ params["w1"] + params["b1"], 0.0)
    h2 = jnp.maximum(h1 @ params["w2"] + params["b2"], 0.0)
    return h2 @ params["w3"] + params["b3"]


if __name__ == "__main__":
    key = jax.random.PRNGKey(0)
    kp, kt, ky, kts, kys = jax.random.split(key, 5)

    params = init_params(kp)
    packed = prepare_packed_params(params)

    # --- single-state evaluation (exact module forward semantics) ---
    t = jax.random.uniform(kt, (), jnp.float32)
    y = jax.random.normal(ky, (Y_DIM,), jnp.float32)
    out = jax.block_until_ready(ode_func_time_variate(t, y, packed))
    ref = _reference(t, y, params)
    assert out.shape == (Y_DIM,)
    assert jnp.allclose(out, ref, atol=1e-5, rtol=1e-5), (out, ref)

    # --- batched evaluation, gridless single-tile path ---
    B1 = 512
    ts1 = jax.random.uniform(kts, (B1,), jnp.float32)
    ys1 = jax.random.normal(kys, (B1, Y_DIM), jnp.float32)
    out1 = jax.block_until_ready(ode_func_time_variate_batched(ts1, ys1, packed))
    ref1 = jax.vmap(lambda tt, yy: _reference(tt, yy, params))(ts1, ys1)
    assert out1.shape == (B1, Y_DIM)
    assert jnp.allclose(out1, ref1, atol=1e-4, rtol=1e-4)

    # --- batched evaluation, gridded path (2 parallel M tiles of 2048) ---
    B2 = 4096
    kts2, kys2 = jax.random.split(jax.random.PRNGKey(1))
    ts2 = jax.random.uniform(kts2, (B2,), jnp.float32)
    ys2 = jax.random.normal(kys2, (B2, Y_DIM), jnp.float32)
    out2 = jax.block_until_ready(ode_func_time_variate_batched(ts2, ys2, packed))
    ref2 = jax.vmap(lambda tt, yy: _reference(tt, yy, params))(ts2, ys2)
    assert out2.shape == (B2, Y_DIM)
    assert jnp.allclose(out2, ref2, atol=1e-4, rtol=1e-4)

    print("KERNEL_OK")
</pallas_src>

<mosaic_0001>
module attributes {stable_mosaic.version = 11 : i64} {
  func.func @_mlp_kernel(%arg0: memref<8x8xf32, #tpu.memory_space<vmem>>, %arg1: memref<8x128xf32, #tpu.memory_space<vmem>>, %arg2: memref<2x128x128xf32, #tpu.memory_space<vmem>>, %arg3: memref<8x4xf32, #tpu.memory_space<vmem>>) attributes {dimension_semantics = [], scalar_prefetch = 0 : i64, scratch_operands = 0 : i64, tpu.core_type = #tpu.core_type<tc>} {
    %c0 = arith.constant 0 : index
    %c0_0 = arith.constant 0 : index
    %0 = vector.load %arg0[%c0, %c0_0] : memref<8x8xf32, #tpu.memory_space<vmem>>, vector<8x8xf32>
    %c0_1 = arith.constant 0 : index
    %c0_2 = arith.constant 0 : index
    %1 = vector.load %arg1[%c0_1, %c0_2] : memref<8x128xf32, #tpu.memory_space<vmem>>, vector<8x128xf32>
    %cst = arith.constant dense<0.000000e+00> : vector<8x128xf32>
    %2 = tpu.matmul %0, %1, %cst {dimension_numbers = #tpu.dot_dimension_numbers<[1], [0], [0], [1], [0, 0, 1, 1], [], []>} : vector<8x8xf32>, vector<8x128xf32>, vector<8x128xf32> -> vector<8x128xf32>
    %cst_3 = arith.constant 0.000000e+00 : f32
    %3 = vector.broadcast %cst_3 : f32 to vector<8x128xf32>
    %4 = arith.maximumf %2, %3 : vector<8x128xf32>
    %c0_4 = arith.constant 0 : index
    %c0_5 = arith.constant 0 : index
    %c0_6 = arith.constant 0 : index
    %5 = vector.load %arg2[%c0_4, %c0_5, %c0_6] : memref<2x128x128xf32, #tpu.memory_space<vmem>>, vector<1x128x128xf32>
    %6 = vector.shape_cast %5 : vector<1x128x128xf32> to vector<128x128xf32>
    %cst_7 = arith.constant dense<0.000000e+00> : vector<8x128xf32>
    %7 = tpu.matmul %4, %6, %cst_7 {dimension_numbers = #tpu.dot_dimension_numbers<[1], [0], [0], [1], [0, 0, 1, 1], [], []>} : vector<8x128xf32>, vector<128x128xf32>, vector<8x128xf32> -> vector<8x128xf32>
    %cst_8 = arith.constant 0.000000e+00 : f32
    %8 = vector.broadcast %cst_8 : f32 to vector<8x128xf32>
    %9 = arith.maximumf %7, %8 : vector<8x128xf32>
    %c1 = arith.constant 1 : index
    %c0_9 = arith.constant 0 : index
    %c0_10 = arith.constant 0 : index
    %10 = vector.load %arg2[%c1, %c0_9, %c0_10] : memref<2x128x128xf32, #tpu.memory_space<vmem>>, vector<1x128x128xf32>
    %11 = vector.shape_cast %10 : vector<1x128x128xf32> to vector<128x128xf32>
    %cst_11 = arith.constant dense<0.000000e+00> : vector<8x128xf32>
    %12 = tpu.matmul %9, %11, %cst_11 {dimension_numbers = #tpu.dot_dimension_numbers<[1], [0], [0], [1], [0, 0, 1, 1], [], []>} : vector<8x128xf32>, vector<128x128xf32>, vector<8x128xf32> -> vector<8x128xf32>
    %13 = vector.extract_strided_slice %12 {offsets = [0, 0], sizes = [8, 4], strides = [1, 1]} : vector<8x128xf32> to vector<8x4xf32>
    %c0_12 = arith.constant 0 : index
    %c0_13 = arith.constant 0 : index
    %14 = vector.load %arg3[%c0_12, %c0_13] : memref<8x4xf32, #tpu.memory_space<vmem>>, vector<8x4xf32>
    tpu.vector_store %arg3[%c0_12, %c0_13], %13 {strides = array<i32>} : memref<8x4xf32, #tpu.memory_space<vmem>>, vector<8x4xf32>,
    return
  }
}

</mosaic_0001>

<llo_original>
// kernel: ode_func_time_variate.1
$region0: #{ode_func_time_variate.1}
  #allocation0 [shape = 'u32[]', space=smem, size = 0x4, offset = 0x4, fixed_abs, tag = 'smem constant byte address 0x4 - core index']
  #allocation1 [shape = 'u32[144,128]{1,0:T(1,128)}', space=vmem, size = 0x12000, scoped, tag = 'internal scratch']
  %s0 = inlined_call_operand.vmem [shape: f32[8,8], index: 0, kind: input, shape index: {}]
  %s1 = inlined_call_operand.vmem [shape: f32[8,128], index: 1, kind: input, shape index: {}]
  %s2 = inlined_call_operand.hbm [shape: f32[2,128,128], index: 2, kind: input, shape index: {}]
  %s3 = inlined_call_operand.vmem [shape: f32[8,4], index: 3, kind: output, shape index: {}]
  %s4 = sld [smem:[#allocation0]]
  $region26: #{ode_func_time_variate.1} parent=0
    _
  %s6 = ssub.s32 1, %s4
  %s7 = scalar_select 0, %s6, %s4
  $region1: #{ode_func_time_variate.1} parent=0
    #allocation2 [shape = 'u8[131072]{0}', space=vmem, size = 0x20000, scoped, tag = 'input window, operand 2, single buffered']
    #allocation3 [shape = 's32[1]{0}', space=sflag, size = 0x4, scoped, tag = 'scoped memory for ode_func_time_variate.1']
    %8 = vsyncpa [#allocation3], 0
    // Predicated region
    $region2: #{ode_func_time_variate.1} parent=1 // pred_check
      _
    $region3: #{ode_func_time_variate.1} parent=1 // pred_check_branch
      %10 = sbr.rel (0) target = $region5
    $region4: #{ode_func_time_variate.1} parent=1 // pred_region
      _
    $region5: #{ode_func_time_variate.1} parent=1 // pred_fallthru
      _
    // Predicated region
    $region6: #{ode_func_time_variate.1} parent=1 // pred_check
      _
    $region7: #{ode_func_time_variate.1} parent=1 // pred_check_branch
      %12 = sbr.rel (0) target = $region9
    $region8: #{ode_func_time_variate.1} parent=1 // pred_region
      _
    $region9: #{ode_func_time_variate.1} parent=1 // pred_fallthru
      _
    // Predicated region
    $region10: #{ode_func_time_variate.1} parent=1 // pred_check
      _
    $region11: #{ode_func_time_variate.1} parent=1 // pred_check_branch
      %14 = sbr.rel (0) target = $region13
    $region12: #{ode_func_time_variate.1} parent=1 // pred_region
      %s16 = ssub.s32 4096, 4096
      %17 = vsyncadd [#allocation3], %s16
      %s18 = sshll.u32 [#allocation2], 4
      %s19 = int_to_ptr.vmem [resolvable:$true] %s18
      %24 = dma.hbm_to_vmem [thread:$0]  %s2, 4096, %s19, [#allocation3], 128, 128, 8
    $region13: #{ode_func_time_variate.1} parent=1 // pred_fallthru
      _
    // Predicated region
    $region14: #{ode_func_time_variate.1} parent=1 // pred_check
      _
    $region15: #{ode_func_time_variate.1} parent=1 // pred_check_branch
      %26 = sbr.rel (0) target = $region17
    $region16: #{ode_func_time_variate.1} parent=1 // pred_region
      %27 = dma.done [#allocation3], 4096
    $region17: #{ode_func_time_variate.1} parent=1 // pred_fallthru
      _
    %v28 = vld [vmem:[%s0] sm:$0xff]
    %v29 = vld [vmem:[%s1] sm:$0xff]
    %vm30 = vcmask 64512
    %v32 = vsel %vm30, %v28, 0
    %34 = vmatprep.subr.mxu0 0.0
    %35 = vmatpush1.msra.mxu0 %v29
    %36 = vmatprep.subr.mxu0 0.0
    %37 = vmatpush1.msra.mxu0 0.0
    %38 = vmatprep.subr.mxu0 0.0
    %39 = vmatpush1.msra.mxu0 0.0
    %40 = vmatprep.subr.mxu0 0.0
    %41 = vmatpush1.msra.mxu0 0.0
    %42 = vmatprep.subr.mxu0 0.0
    %43 = vmatpush1.msra.mxu0 0.0
    %44 = vmatprep.subr.mxu0 0.0
    %45 = vmatpush1.msra.mxu0 0.0
    %46 = vmatprep.subr.mxu0 0.0
    %47 = vmatpush1.msra.mxu0 0.0
    %48 = vmatprep.subr.mxu0 0.0
    %49 = vmatpush1.msra.mxu0 0.0
    %50 = vmatprep.subr.mxu0 0.0
    %51 = vmatpush1.msra.mxu0 0.0
    %52 = vmatprep.subr.mxu0 0.0
    %53 = vmatpush1.msra.mxu0 0.0
    %54 = vmatprep.subr.mxu0 0.0
    %55 = vmatpush1.msra.mxu0 0.0
    %56 = vmatprep.subr.mxu0 0.0
    %57 = vmatpush1.msra.mxu0 0.0
    %58 = vmatprep.subr.mxu0 0.0
    %59 = vmatpush1.msra.mxu0 0.0
    %60 = vmatprep.subr.mxu0 0.0
    %61 = vmatpush1.msra.mxu0 0.0
    %62 = vmatprep.subr.mxu0 0.0
    %63 = vmatpush1.msra.mxu0 0.0
    %64 = vmatprep.subr.mxu0 0.0
    %65 = vmatpush1.msra.mxu0 0.0
    %66 = vmatprep.subr.mxu0 0.0
    %67 = vmatpush1.msra.mxu0 0.0
    %68 = vmatprep.subr.mxu0 0.0
    %69 = vmatpush1.msra.mxu0 0.0
    %70 = vmatprep.subr.mxu0 0.0
    %71 = vmatpush1.msra.mxu0 0.0
    %72 = vmatprep.subr.mxu0 0.0
    %73 = vmatpush1.msra.mxu0 0.0
    %74 = vmatprep.subr.mxu0 0.0
    %75 = vmatpush1.msra.mxu0 0.0
    %76 = vmatprep.subr.mxu0 0.0
    %77 = vmatpush1.msra.mxu0 0.0
    %78 = vmatprep.subr.mxu0 0.0
    %79 = vmatpush1.msra.mxu0 0.0
    %80 = vmatprep.subr.mxu0 0.0
    %81 = vmatpush1.msra.mxu0 0.0
    %82 = vmatprep.subr.mxu0 0.0
    %83 = vmatpush1.msra.mxu0 0.0
    %84 = vmatprep.subr.mxu0 0.0
    %85 = vmatpush1.msra.mxu0 0.0
    %86 = vmatprep.subr.mxu0 0.0
    %87 = vmatpush1.msra.mxu0 0.0
    %88 = vmatprep.subr.mxu0 0.0
    %89 = vmatpush1.msra.mxu0 0.0
    %90 = vmatprep.subr.mxu0 0.0
    %91 = vmatpush1.msra.mxu0 0.0
    %92 = vmatprep.subr.mxu0 0.0
    %93 = vmatpush1.msra.mxu0 0.0
    %94 = vmatprep.subr.mxu0 0.0
    %95 = vmatpush1.msra.mxu0 0.0
    %96 = vmatprep.subr.mxu0 0.0
    %97 = vmatpush1.msra.mxu0 0.0
    %98 = vmatprep.mubr.f32.mxu0 0.0
    %99 = vmatmul.mubr.f32.gmra.mrb[0].mxu0 %v32
    %v100 = vpop.f32.mrb[0].mxu0
    %v101 = vadd.f32 0.0, %v100
    %v102 = vpop.f32.mrb[0].mxu0
    %103 = vdwg.mxu0
    %v104 = vmax.f32 %v101, 0.0
    %v105 = vld [vmem:[#allocation2] sm:$0xff]
    %v106 = vld [vmem:[#allocation2 + $0x8] sm:$0xff]
    %v107 = vld [vmem:[#allocation2 + $0x10] sm:$0xff]
    %v108 = vld [vmem:[#allocation2 + $0x18] sm:$0xff]
    %v109 = vld [vmem:[#allocation2 + $0x20] sm:$0xff]
    %v110 = vld [vmem:[#allocation2 + $0x28] sm:$0xff]
    %v111 = vld [vmem:[#allocation2 + $0x30] sm:$0xff]
    %v112 = vld [vmem:[#allocation2 + $0x38] sm:$0xff]
    %v113 = vld [vmem:[#allocation2 + $0x40] sm:$0xff]
    %v114 = vld [vmem:[#allocation2 + $0x48] sm:$0xff]
    %v115 = vld [vmem:[#allocation2 + $0x50] sm:$0xff]
    %v116 = vld [vmem:[#allocation2 + $0x58] sm:$0xff]
    %v117 = vld [vmem:[#allocation2 + $0x60] sm:$0xff]
    %v118 = vld [vmem:[#allocation2 + $0x68] sm:$0xff]
    %v119 = vld [vmem:[#allocation2 + $0x70] sm:$0xff]
    %v120 = vld [vmem:[#allocation2 + $0x78] sm:$0xff]
    %121 = vmatprep.subr.mxu0 0.0
    %122 = vmatpush1.msra.mxu0 %v105
    %123 = vmatprep.subr.mxu0 0.0
    %124 = vmatpush1.msra.mxu0 %v106
    %125 = vmatprep.subr.mxu0 0.0
    %126 = vmatpush1.msra.mxu0 %v107
    %127 = vmatprep.subr.mxu0 0.0
    %128 = vmatpush1.msra.mxu0 %v108
    %129 = vmatprep.subr.mxu0 0.0
    %130 = vmatpush1.msra.mxu0 %v109
    %131 = vmatprep.subr.mxu0 0.0
    %132 = vmatpush1.msra.mxu0 %v110
    %133 = vmatprep.subr.mxu0 0.0
    %134 = vmatpush1.msra.mxu0 %v111
    %135 = vmatprep.subr.mxu0 0.0
    %136 = vmatpush1.msra.mxu0 %v112
    %137 = vmatprep.subr.mxu0 0.0
    %138 = vmatpush1.msra.mxu0 %v113
    %139 = vmatprep.subr.mxu0 0.0
    %140 = vmatpush1.msra.mxu0 %v114
    %141 = vmatprep.subr.mxu0 0.0
    %142 = vmatpush1.msra.mxu0 %v115
    %143 = vmatprep.subr.mxu0 0.0
    %144 = vmatpush1.msra.mxu0 %v116
    %145 = vmatprep.subr.mxu0 0.0
    %146 = vmatpush1.msra.mxu0 %v117
    %147 = vmatprep.subr.mxu0 0.0
    %148 = vmatpush1.msra.mxu0 %v118
    %149 = vmatprep.subr.mxu0 0.0
    %150 = vmatpush1.msra.mxu0 %v119
    %151 = vmatprep.subr.mxu0 0.0
    %152 = vmatpush1.msra.mxu0 %v120
    %153 = vmatprep.subr.mxu0 0.0
    %154 = vmatpush1.msra.mxu0 0.0
    %155 = vmatprep.subr.mxu0 0.0
    %156 = vmatpush1.msra.mxu0 0.0
    %157 = vmatprep.subr.mxu0 0.0
    %158 = vmatpush1.msra.mxu0 0.0
    %159 = vmatprep.subr.mxu0 0.0
    %160 = vmatpush1.msra.mxu0 0.0
    %161 = vmatprep.subr.mxu0 0.0
    %162 = vmatpush1.msra.mxu0 0.0
    %163 = vmatprep.subr.mxu0 0.0
    %164 = vmatpush1.msra.mxu0 0.0
    %165 = vmatprep.subr.mxu0 0.0
    %166 = vmatpush1.msra.mxu0 0.0
    %167 = vmatprep.subr.mxu0 0.0
    %168 = vmatpush1.msra.mxu0 0.0
    %169 = vmatprep.subr.mxu0 0.0
    %170 = vmatpush1.msra.mxu0 0.0
    %171 = vmatprep.subr.mxu0 0.0
    %172 = vmatpush1.msra.mxu0 0.0
    %173 = vmatprep.subr.mxu0 0.0
    %174 = vmatpush1.msra.mxu0 0.0
    %175 = vmatprep.subr.mxu0 0.0
    %176 = vmatpush1.msra.mxu0 0.0
    %177 = vmatprep.subr.mxu0 0.0
    %178 = vmatpush1.msra.mxu0 0.0
    %179 = vmatprep.subr.mxu0 0.0
    %180 = vmatpush1.msra.mxu0 0.0
    %181 = vmatprep.subr.mxu0 0.0
    %182 = vmatpush1.msra.mxu0 0.0
    %183 = vmatprep.subr.mxu0 0.0
    %184 = vmatpush1.msra.mxu0 0.0
    %185 = vmatprep.mubr.f32.mxu0 0.0
    %186 = vmatmul.mubr.f32.gmra.mrb[0].mxu0 %v104
    %v187 = vpop.f32.mrb[0].mxu0
    %v188 = vadd.f32 0.0, %v187
    %v189 = vpop.f32.mrb[0].mxu0
    %190 = vdwg.mxu0
    %v191 = vmax.f32 %v188, 0.0
    %s192 = scalar_lea.vmem [#allocation2], 128
    %v193 = vld [vmem:[%s192] sm:$0xff]
    %v194 = vld [vmem:[%s192 + $0x8] sm:$0xff]
    %v195 = vld [vmem:[%s192 + $0x10] sm:$0xff]
    %v196 = vld [vmem:[%s192 + $0x18] sm:$0xff]
    %v197 = vld [vmem:[%s192 + $0x20] sm:$0xff]
    %v198 = vld [vmem:[%s192 + $0x28] sm:$0xff]
    %v199 = vld [vmem:[%s192 + $0x30] sm:$0xff]
    %v200 = vld [vmem:[%s192 + $0x38] sm:$0xff]
    %v201 = vld [vmem:[%s192 + $0x40] sm:$0xff]
    %v202 = vld [vmem:[%s192 + $0x48] sm:$0xff]
    %v203 = vld [vmem:[%s192 + $0x50] sm:$0xff]
    %v204 = vld [vmem:[%s192 + $0x58] sm:$0xff]
    %v205 = vld [vmem:[%s192 + $0x60] sm:$0xff]
    %v206 = vld [vmem:[%s192 + $0x68] sm:$0xff]
    %v207 = vld [vmem:[%s192 + $0x70] sm:$0xff]
    %v208 = vld [vmem:[%s192 + $0x78] sm:$0xff]
    %209 = vmatprep.subr.mxu0 0.0
    %210 = vmatpush1.msra.mxu0 %v193
    %211 = vmatprep.subr.mxu0 0.0
    %212 = vmatpush1.msra.mxu0 %v194
    %213 = vmatprep.subr.mxu0 0.0
    %214 = vmatpush1.msra.mxu0 %v195
    %215 = vmatprep.subr.mxu0 0.0
    %216 = vmatpush1.msra.mxu0 %v196
    %217 = vmatprep.subr.mxu0 0.0
    %218 = vmatpush1.msra.mxu0 %v197
    %219 = vmatprep.subr.mxu0 0.0
    %220 = vmatpush1.msra.mxu0 %v198
    %221 = vmatprep.subr.mxu0 0.0
    %222 = vmatpush1.msra.mxu0 %v199
    %223 = vmatprep.subr.mxu0 0.0
    %224 = vmatpush1.msra.mxu0 %v200
    %225 = vmatprep.subr.mxu0 0.0
    %226 = vmatpush1.msra.mxu0 %v201
    %227 = vmatprep.subr.mxu0 0.0
    %228 = vmatpush1.msra.mxu0 %v202
    %229 = vmatprep.subr.mxu0 0.0
    %230 = vmatpush1.msra.mxu0 %v203
    %231 = vmatprep.subr.mxu0 0.0
    %232 = vmatpush1.msra.mxu0 %v204
    %233 = vmatprep.subr.mxu0 0.0
    %234 = vmatpush1.msra.mxu0 %v205
    %235 = vmatprep.subr.mxu0 0.0
    %236 = vmatpush1.msra.mxu0 %v206
    %237 = vmatprep.subr.mxu0 0.0
    %238 = vmatpush1.msra.mxu0 %v207
    %239 = vmatprep.subr.mxu0 0.0
    %240 = vmatpush1.msra.mxu0 %v208
    %241 = vmatprep.subr.mxu0 0.0
    %242 = vmatpush1.msra.mxu0 0.0
    %243 = vmatprep.subr.mxu0 0.0
    %244 = vmatpush1.msra.mxu0 0.0
    %245 = vmatprep.subr.mxu0 0.0
    %246 = vmatpush1.msra.mxu0 0.0
    %247 = vmatprep.subr.mxu0 0.0
    %248 = vmatpush1.msra.mxu0 0.0
    %249 = vmatprep.subr.mxu0 0.0
    %250 = vmatpush1.msra.mxu0 0.0
    %251 = vmatprep.subr.mxu0 0.0
    %252 = vmatpush1.msra.mxu0 0.0
    %253 = vmatprep.subr.mxu0 0.0
    %254 = vmatpush1.msra.mxu0 0.0
    %255 = vmatprep.subr.mxu0 0.0
    %256 = vmatpush1.msra.mxu0 0.0
    %257 = vmatprep.subr.mxu0 0.0
    %258 = vmatpush1.msra.mxu0 0.0
    %259 = vmatprep.subr.mxu0 0.0
    %260 = vmatpush1.msra.mxu0 0.0
    %261 = vmatprep.subr.mxu0 0.0
    %262 = vmatpush1.msra.mxu0 0.0
    %263 = vmatprep.subr.mxu0 0.0
    %264 = vmatpush1.msra.mxu0 0.0
    %265 = vmatprep.subr.mxu0 0.0
    %266 = vmatpush1.msra.mxu0 0.0
    %267 = vmatprep.subr.mxu0 0.0
    %268 = vmatpush1.msra.mxu0 0.0
    %269 = vmatprep.subr.mxu0 0.0
    %270 = vmatpush1.msra.mxu0 0.0
    %271 = vmatprep.subr.mxu0 0.0
    %272 = vmatpush1.msra.mxu0 0.0
    %273 = vmatprep.mubr.f32.mxu0 0.0
    %274 = vmatmul.mubr.f32.gmra.mrb[0].mxu0 %v191
    %v275 = vpop.f32.mrb[0].mxu0
    %v276 = vadd.f32 0.0, %v275
    %v277 = vpop.f32.mrb[0].mxu0
    %278 = vdwg.mxu0
    %vm279 = vcmask 31744
    %280 = vst.msk [vmem:[%s3] sm:$0xff] %vm279, %v276
    // Predicated region
    $region18: #{ode_func_time_variate.1} parent=1 // pred_check
      _
    $region19: #{ode_func_time_variate.1} parent=1 // pred_check_branch
      %282 = sbr.rel (0) target = $region21
    $region20: #{ode_func_time_variate.1} parent=1 // pred_region
      _
    $region21: #{ode_func_time_variate.1} parent=1 // pred_fallthru
      _
    // Predicated region
    $region22: #{ode_func_time_variate.1} parent=1 // pred_check
      _
    $region23: #{ode_func_time_variate.1} parent=1 // pred_check_branch
      %284 = sbr.rel (0) target = $region25
    $region24: #{ode_func_time_variate.1} parent=1 // pred_region
      _
    $region25: #{ode_func_time_variate.1} parent=1 // pred_fallthru
      _
    %285 = vsyncpa [#allocation3], 1

</llo_original>
